<compile_context>
chip_gen: v6e
topology: v6e:2x2x1
jax: 0.10.0
libtpu: 0.0.40
codegen_flags: <defaults>
</compile_context>

<pallas_src>
import functools

import jax
import jax.numpy as jnp
from jax.experimental import pallas as pl
from jax.experimental.pallas import tpu as pltpu


def _cdiv(a, b):
    return (a + b - 1) // b


def _round_up(a, m):
    return _cdiv(a, m) * m


# ---------------------------------------------------------------------------
# Kernel
# ---------------------------------------------------------------------------
def affine_transform_kernel(x_ref, mask_ref, w1_ref, b1_ref, w2_ref, b2_ref,
                            w3_ref, b3_ref, sc_ref, y_ref, ls_ref,
                            *, reverse, d_pad):
    x = x_ref[...]                       # (TB, Dp) f32
    mask = mask_ref[...]                 # (1, Dp)  f32 (padded lanes are 0)

    # Matmul operands in bf16, accumulate in f32 on the MXU.
    x_masked = (x * mask).astype(jnp.bfloat16)

    h = jnp.dot(x_masked, w1_ref[...], preferred_element_type=jnp.float32)
    h = jnp.maximum(h + b1_ref[...], 0.0).astype(jnp.bfloat16)
    h = jnp.dot(h, w2_ref[...], preferred_element_type=jnp.float32)
    h = jnp.maximum(h + b2_ref[...], 0.0).astype(jnp.bfloat16)

    # Fused third layer: one (TB, 2*Dp) matmul; lane-aligned split afterwards.
    st = jnp.dot(h, w3_ref[...], preferred_element_type=jnp.float32) + b3_ref[...]
    log_s = st[:, :d_pad]
    t = st[:, d_pad:]

    # Elementwise epilogue in f32 (VPU/EUP).
    scale = sc_ref[0]                    # scalars from SMEM
    scale_shift = sc_ref[1]
    inv_mask = 1.0 - mask
    log_s = (scale * jnp.tanh(log_s) + scale_shift) * inv_mask
    t = t * inv_mask

    if reverse:
        y = (x - t) * jnp.exp(-log_s)
    else:
        y = x * jnp.exp(log_s) + t

    y_ref[...] = y                       # lane-dense unmasked stores
    ls_ref[...] = log_s


# ---------------------------------------------------------------------------
# Tiling planner (weight-aware, generation-aware)
# ---------------------------------------------------------------------------
def _plan_tiling(B, d_pad, h_pad):
    b8 = _round_up(max(B, 8), 8)

    # Generation-aware VMEM limit (v5e/v6e: 128 MiB physical; v7x: 64 MiB/TC).
    try:
        vmem_cap = int(pltpu.get_tpu_info().vmem_capacity_bytes)
    except Exception:
        vmem_cap = 64 * 1024 * 1024                      # conservative (v7x)
    if vmem_cap >= 100 * 1024 * 1024:
        vmem_limit = 64 * 1024 * 1024                    # v5e / v6e
    else:
        vmem_limit = min(48 * 1024 * 1024, vmem_cap * 3 // 4)   # v7x

    # Resident bf16 weights + f32 biases/mask; default 2 pipeline buffers.
    # TODO(synk): pipeline_mode=pl.Buffered(1) on the constant-index specs
    # would halve this resident footprint for very large hidden sizes.
    weight_bytes = 2 * (d_pad * h_pad + h_pad * h_pad + h_pad * 2 * d_pad)
    weight_bytes += 4 * (2 * h_pad + 2 * d_pad + d_pad)
    resident = 2 * weight_bytes

    headroom = 4 * 1024 * 1024
    io_budget = max(2 * 1024 * 1024, vmem_limit - resident - headroom)

    # Per batch row: double-buffered x / y / log_s (f32) + in-flight
    # intermediates (h in f32 + bf16, fused layer-3 slab, temporaries).
    per_row = (3 * 2 * 4 * d_pad) + (4 + 2 + 4) * h_pad + (2 * 4 * 2 * d_pad)
    tb_cap = max(8, min(8192, (io_budget // per_row) // 8 * 8))

    # >= 2 grid steps whenever possible (v7x megacore); padding waste stays
    # at <= ~8 rows per tile instead of up to a full tile.
    n_tiles = max(_cdiv(b8, tb_cap), 2 if b8 >= 16 else 1)
    tb = _round_up(_cdiv(b8, n_tiles), 8)
    b_pad = n_tiles * tb
    return tb, b_pad, n_tiles, vmem_limit


# ---------------------------------------------------------------------------
# Wrapper
# ---------------------------------------------------------------------------
def affine_transform_forward(x, mask, params, reverse=False):
    """x: (B, D) f32; mask: (D,) f32; params: dict of MLP + scale params."""
    B, D = x.shape
    H = params["w1"].shape[1]

    # Lane-dense feature dims (biggest single lever on store-bound kernels).
    Dp = _round_up(D, 128)
    Hp = _round_up(H, 128)

    TB, B_pad, n_tiles, vmem_limit = _plan_tiling(B, Dp, Hp)

    # --- input padding (zeros are numerically inert, see header) -----------
    x_p = x
    if B_pad != B or Dp != D:
        x_p = jnp.pad(x, ((0, B_pad - B), (0, Dp - D)))

    # --- parameter preprocessing (one-time, outside kernel) ----------------
    maskp = jnp.pad(mask.astype(jnp.float32), (0, Dp - D)).reshape(1, Dp)
    w1 = jnp.pad(params["w1"], ((0, Dp - D), (0, Hp - H))).astype(jnp.bfloat16)
    w2 = jnp.pad(params["w2"], ((0, Hp - H), (0, Hp - H))).astype(jnp.bfloat16)
    w3 = jnp.zeros((Hp, 2 * Dp), jnp.float32)
    w3 = w3.at[:H, :D].set(params["w3"][:, :D])          # log_s columns
    w3 = w3.at[:H, Dp:Dp + D].set(params["w3"][:, D:])   # t columns
    w3 = w3.astype(jnp.bfloat16)
    b1 = jnp.pad(params["b1"], (0, Hp - H)).reshape(1, Hp).astype(jnp.float32)
    b2 = jnp.pad(params["b2"], (0, Hp - H)).reshape(1, Hp).astype(jnp.float32)
    b3 = jnp.zeros((1, 2 * Dp), jnp.float32)
    b3 = b3.at[0, :D].set(params["b3"][:D])
    b3 = b3.at[0, Dp:Dp + D].set(params["b3"][D:])
    sc = jnp.stack([params["scale"].reshape(()),
                    params["scale_shift"].reshape(())]).astype(jnp.float32)

    const = lambda i: (0, 0)             # weights resident across the grid
    grid = (n_tiles,)

    grid_spec = pltpu.PrefetchScalarGridSpec(
        num_scalar_prefetch=0,
        grid=grid,
        in_specs=[
            pl.BlockSpec((TB, Dp), lambda i: (i, 0)),                 # x tile
            pl.BlockSpec((1, Dp), const),                             # mask
            pl.BlockSpec((Dp, Hp), const), pl.BlockSpec((1, Hp), const),        # w1, b1
            pl.BlockSpec((Hp, Hp), const), pl.BlockSpec((1, Hp), const),        # w2, b2
            pl.BlockSpec((Hp, 2 * Dp), const), pl.BlockSpec((1, 2 * Dp), const),  # w3, b3
            pl.BlockSpec(memory_space=pltpu.MemorySpace.SMEM),        # [scale, shift]
        ],
        out_specs=[
            pl.BlockSpec((TB, Dp), lambda i: (i, 0)),                 # y
            pl.BlockSpec((TB, Dp), lambda i: (i, 0)),                 # log_s
        ],
    )

    flops = int(2 * B_pad * (Dp * Hp + Hp * Hp + Hp * 2 * Dp) + 12 * B_pad * Dp)
    transcendentals = int(2 * B_pad * Dp)                             # tanh + exp
    bytes_accessed = int(3 * 4 * B_pad * Dp
                         + 2 * (Dp * Hp + Hp * Hp + 2 * Hp * Dp)
                         + 4 * (2 * Hp + 3 * Dp) + 8)

    kernel = functools.partial(affine_transform_kernel,
                               reverse=reverse, d_pad=Dp)

    y_pad, ls_pad = pl.pallas_call(
        kernel,
        out_shape=(jax.ShapeDtypeStruct((B_pad, Dp), jnp.float32),
                   jax.ShapeDtypeStruct((B_pad, Dp), jnp.float32)),
        grid_spec=grid_spec,
        compiler_params=pltpu.CompilerParams(
            dimension_semantics=("parallel",),
            vmem_limit_bytes=vmem_limit),
        cost_estimate=pl.CostEstimate(flops=flops,
                                      transcendentals=transcendentals,
                                      bytes_accessed=bytes_accessed),
    )(x_p, maskp, w1, b1, w2, b2, w3, b3, sc)

    # No-op slices when B, D were already aligned.
    return y_pad[:B, :D], ls_pad[:B, :D]


# ---------------------------------------------------------------------------
# Pure-JAX references (for verification only).
# ---------------------------------------------------------------------------
def reference_forward(x, mask, params, reverse=False, matmul_dtype=jnp.float32):
    """Mirrors the PyTorch module; matmul_dtype=bfloat16 mirrors kernel numerics."""
    B, D = x.shape
    m = jnp.broadcast_to(mask, (B, D))
    x_ = (x * m).astype(matmul_dtype)
    w1 = params["w1"].astype(matmul_dtype)
    w2 = params["w2"].astype(matmul_dtype)
    w3 = params["w3"].astype(matmul_dtype)
    h = jnp.maximum(jnp.dot(x_, w1, preferred_element_type=jnp.float32)
                    + params["b1"], 0.0).astype(matmul_dtype)
    h = jnp.maximum(jnp.dot(h, w2, preferred_element_type=jnp.float32)
                    + params["b2"], 0.0).astype(matmul_dtype)
    out = jnp.dot(h, w3, preferred_element_type=jnp.float32) + params["b3"]
    log_s, t = out[:, :D], out[:, D:]
    log_s = params["scale"] * jnp.tanh(log_s) + params["scale_shift"]
    t = t * (1.0 - m)
    log_s = log_s * (1.0 - m)
    if reverse:
        y = (x - t) * jnp.exp(-log_s)
    else:
        y = x * jnp.exp(log_s) + t
    return y, log_s


def build_checkerboard_mask(dim, mask_type="left"):
    half = dim // 2
    m = jnp.tile(jnp.array([0.0, 1.0], dtype=jnp.float32), half)  # CHECKERBOARD
    if mask_type == "right":
        m = 1.0 - m
    return m


if __name__ == "__main__":
    B, D, H = 8, 16, 32          # batch, feature dim, hidden_size (n_hidden=2)
    key = jax.random.PRNGKey(0)
    k = jax.random.split(key, 8)

    # Deterministic parameter init (shapes from the module's __init__).
    # NOTE: scale / scale_shift are zero-init in __init__; small nonzero
    # deterministic values are used so the tanh-scaling path is exercised.
    params = {
        "w1": 0.1 * jax.random.normal(k[0], (D, H), jnp.float32),
        "b1": 0.1 * jax.random.normal(k[1], (H,), jnp.float32),
        "w2": 0.1 * jax.random.normal(k[2], (H, H), jnp.float32),
        "b2": 0.1 * jax.random.normal(k[3], (H,), jnp.float32),
        "w3": 0.1 * jax.random.normal(k[4], (H, 2 * D), jnp.float32),
        "b3": 0.1 * jax.random.normal(k[5], (2 * D,), jnp.float32),
        "scale": jnp.array([0.5], dtype=jnp.float32),
        "scale_shift": jnp.array([0.1], dtype=jnp.float32),
    }

    mask = build_checkerboard_mask(D, mask_type="left")   # MaskType.CHECKERBOARD
    x = jax.random.normal(k[6], (B, D), jnp.float32)

    y, log_s = affine_transform_forward(x, mask, params, reverse=False)
    y = jax.block_until_ready(y)
    log_s = jax.block_until_ready(log_s)

    # Tight check vs a reference that mirrors the kernel's bf16-matmul numerics.
    y_bf, ls_bf = reference_forward(x, mask, params, reverse=False,
                                    matmul_dtype=jnp.bfloat16)
    assert jnp.allclose(y, y_bf, atol=1e-4, rtol=1e-4)
    assert jnp.allclose(log_s, ls_bf, atol=1e-4, rtol=1e-4)

    # Loose check vs the full-f32 module semantics (bf16 operand rounding only).
    y_ref, ls_ref = reference_forward(x, mask, params, reverse=False)
    assert jnp.allclose(y, y_ref, atol=1e-1, rtol=1e-1)
    assert jnp.allclose(log_s, ls_ref, atol=1e-1, rtol=1e-1)

    # Exercise the reverse (inverse) direction: exact round-trip up to f32 eps.
    x_rec, _ = affine_transform_forward(y, mask, params, reverse=True)
    x_rec = jax.block_until_ready(x_rec)
    assert jnp.allclose(x_rec, x, atol=1e-4, rtol=1e-4)

    print("KERNEL_OK")
</pallas_src>

<mosaic_0001>
module attributes {stable_mosaic.version = 11 : i64} {
  func.func @affine_transform_kernel(%arg0: i32, %arg1: memref<8x128xf32, #tpu.memory_space<vmem>>, %arg2: memref<1x128xf32, #tpu.memory_space<vmem>>, %arg3: memref<128x128xbf16, #tpu.memory_space<vmem>>, %arg4: memref<1x128xf32, #tpu.memory_space<vmem>>, %arg5: memref<128x128xbf16, #tpu.memory_space<vmem>>, %arg6: memref<1x128xf32, #tpu.memory_space<vmem>>, %arg7: memref<128x256xbf16, #tpu.memory_space<vmem>>, %arg8: memref<1x256xf32, #tpu.memory_space<vmem>>, %arg9: memref<2xf32, #tpu.memory_space<smem>>, %arg10: memref<8x128xf32, #tpu.memory_space<vmem>>, %arg11: memref<8x128xf32, #tpu.memory_space<vmem>>) attributes {dimension_semantics = [#tpu.dimension_semantics<parallel>], iteration_bounds = array<i64: 1>, scalar_prefetch = 0 : i64, scratch_operands = 0 : i64, tpu.core_type = #tpu.core_type<tc>, window_params = [{transform_indices = @transform_0, window_bounds = array<i64: 8, 128>}, {pipeline_mode = #tpu.pipeline_mode<synchronous>, transform_indices = @transform_1, window_bounds = array<i64: 1, 128>}, {pipeline_mode = #tpu.pipeline_mode<synchronous>, transform_indices = @transform_2, window_bounds = array<i64: 128, 128>}, {pipeline_mode = #tpu.pipeline_mode<synchronous>, transform_indices = @transform_3, window_bounds = array<i64: 1, 128>}, {pipeline_mode = #tpu.pipeline_mode<synchronous>, transform_indices = @transform_4, window_bounds = array<i64: 128, 128>}, {pipeline_mode = #tpu.pipeline_mode<synchronous>, transform_indices = @transform_5, window_bounds = array<i64: 1, 128>}, {pipeline_mode = #tpu.pipeline_mode<synchronous>, transform_indices = @transform_6, window_bounds = array<i64: 128, 256>}, {pipeline_mode = #tpu.pipeline_mode<synchronous>, transform_indices = @transform_7, window_bounds = array<i64: 1, 256>}, {transform_indices = @transform_8, window_bounds = array<i64: 2>}, {transform_indices = @transform_9, window_bounds = array<i64: 8, 128>}, {transform_indices = @transform_10, window_bounds = array<i64: 8, 128>}]} {
    %c0 = arith.constant 0 : index
    %c0_0 = arith.constant 0 : index
    %0 = vector.load %arg1[%c0, %c0_0] : memref<8x128xf32, #tpu.memory_space<vmem>>, vector<8x128xf32>
    %c0_1 = arith.constant 0 : index
    %c0_2 = arith.constant 0 : index
    %1 = vector.load %arg2[%c0_1, %c0_2] : memref<1x128xf32, #tpu.memory_space<vmem>>, vector<1x128xf32>
    %2 = vector.broadcast %1 : vector<1x128xf32> to vector<8x128xf32>
    %3 = arith.mulf %0, %2 : vector<8x128xf32>
    %4 = arith.truncf %3 : vector<8x128xf32> to vector<8x128xbf16>
    %c0_3 = arith.constant 0 : index
    %c0_4 = arith.constant 0 : index
    %5 = vector.load %arg3[%c0_3, %c0_4] : memref<128x128xbf16, #tpu.memory_space<vmem>>, vector<128x128xbf16>
    %cst = arith.constant dense<0.000000e+00> : vector<8x128xf32>
    %6 = tpu.matmul %4, %5, %cst {dimension_numbers = #tpu.dot_dimension_numbers<[1], [0], [0], [1], [0, 0, 1, 1], [], []>} : vector<8x128xbf16>, vector<128x128xbf16>, vector<8x128xf32> -> vector<8x128xf32>
    %c0_5 = arith.constant 0 : index
    %c0_6 = arith.constant 0 : index
    %7 = vector.load %arg4[%c0_5, %c0_6] : memref<1x128xf32, #tpu.memory_space<vmem>>, vector<1x128xf32>
    %8 = vector.broadcast %7 : vector<1x128xf32> to vector<8x128xf32>
    %9 = arith.addf %6, %8 : vector<8x128xf32>
    %cst_7 = arith.constant 0.000000e+00 : f32
    %10 = vector.broadcast %cst_7 : f32 to vector<8x128xf32>
    %11 = arith.maximumf %9, %10 : vector<8x128xf32>
    %12 = arith.truncf %11 : vector<8x128xf32> to vector<8x128xbf16>
    %c0_8 = arith.constant 0 : index
    %c0_9 = arith.constant 0 : index
    %13 = vector.load %arg5[%c0_8, %c0_9] : memref<128x128xbf16, #tpu.memory_space<vmem>>, vector<128x128xbf16>
    %cst_10 = arith.constant dense<0.000000e+00> : vector<8x128xf32>
    %14 = tpu.matmul %12, %13, %cst_10 {dimension_numbers = #tpu.dot_dimension_numbers<[1], [0], [0], [1], [0, 0, 1, 1], [], []>} : vector<8x128xbf16>, vector<128x128xbf16>, vector<8x128xf32> -> vector<8x128xf32>
    %c0_11 = arith.constant 0 : index
    %c0_12 = arith.constant 0 : index
    %15 = vector.load %arg6[%c0_11, %c0_12] : memref<1x128xf32, #tpu.memory_space<vmem>>, vector<1x128xf32>
    %16 = vector.broadcast %15 : vector<1x128xf32> to vector<8x128xf32>
    %17 = arith.addf %14, %16 : vector<8x128xf32>
    %cst_13 = arith.constant 0.000000e+00 : f32
    %18 = vector.broadcast %cst_13 : f32 to vector<8x128xf32>
    %19 = arith.maximumf %17, %18 : vector<8x128xf32>
    %20 = arith.truncf %19 : vector<8x128xf32> to vector<8x128xbf16>
    %c0_14 = arith.constant 0 : index
    %c0_15 = arith.constant 0 : index
    %21 = vector.load %arg7[%c0_14, %c0_15] : memref<128x256xbf16, #tpu.memory_space<vmem>>, vector<128x256xbf16>
    %cst_16 = arith.constant dense<0.000000e+00> : vector<8x256xf32>
    %22 = tpu.matmul %20, %21, %cst_16 {dimension_numbers = #tpu.dot_dimension_numbers<[1], [0], [0], [1], [0, 0, 1, 1], [], []>} : vector<8x128xbf16>, vector<128x256xbf16>, vector<8x256xf32> -> vector<8x256xf32>
    %c0_17 = arith.constant 0 : index
    %c0_18 = arith.constant 0 : index
    %23 = vector.load %arg8[%c0_17, %c0_18] : memref<1x256xf32, #tpu.memory_space<vmem>>, vector<1x256xf32>
    %24 = vector.broadcast %23 : vector<1x256xf32> to vector<8x256xf32>
    %25 = arith.addf %22, %24 : vector<8x256xf32>
    %26 = vector.extract_strided_slice %25 {offsets = [0, 0], sizes = [8, 128], strides = [1, 1]} : vector<8x256xf32> to vector<8x128xf32>
    %27 = vector.extract_strided_slice %25 {offsets = [0, 128], sizes = [8, 128], strides = [1, 1]} : vector<8x256xf32> to vector<8x128xf32>
    %c0_19 = arith.constant 0 : index
    %28 = memref.load %arg9[%c0_19] : memref<2xf32, #tpu.memory_space<smem>>
    %c1 = arith.constant 1 : index
    %29 = memref.load %arg9[%c1] : memref<2xf32, #tpu.memory_space<smem>>
    %cst_20 = arith.constant 1.000000e+00 : f32
    %30 = vector.broadcast %cst_20 : f32 to vector<1x128xf32>
    %31 = arith.subf %30, %1 : vector<1x128xf32>
    %32 = math.tanh %26 : vector<8x128xf32>
    %33 = vector.broadcast %28 : f32 to vector<8x128xf32>
    %34 = arith.mulf %33, %32 : vector<8x128xf32>
    %35 = vector.broadcast %29 : f32 to vector<8x128xf32>
    %36 = arith.addf %34, %35 : vector<8x128xf32>
    %37 = vector.broadcast %31 : vector<1x128xf32> to vector<8x128xf32>
    %38 = arith.mulf %36, %37 : vector<8x128xf32>
    %39 = vector.broadcast %31 : vector<1x128xf32> to vector<8x128xf32>
    %40 = arith.mulf %27, %39 : vector<8x128xf32>
    %41 = math.exp %38 : vector<8x128xf32>
    %42 = arith.mulf %0, %41 : vector<8x128xf32>
    %43 = arith.addf %42, %40 : vector<8x128xf32>
    %c0_21 = arith.constant 0 : index
    %c0_22 = arith.constant 0 : index
    %44 = vector.load %arg10[%c0_21, %c0_22] : memref<8x128xf32, #tpu.memory_space<vmem>>, vector<8x128xf32>
    tpu.vector_store %arg10[%c0_21, %c0_22], %43 {strides = array<i32>} : memref<8x128xf32, #tpu.memory_space<vmem>>, vector<8x128xf32>,
    %c0_23 = arith.constant 0 : index
    %c0_24 = arith.constant 0 : index
    %45 = vector.load %arg11[%c0_23, %c0_24] : memref<8x128xf32, #tpu.memory_space<vmem>>, vector<8x128xf32>
    tpu.vector_store %arg11[%c0_23, %c0_24], %38 {strides = array<i32>} : memref<8x128xf32, #tpu.memory_space<vmem>>, vector<8x128xf32>,
    return
  }
  func.func @transform_0(%arg0: i32) -> (i32, i32) {
    %c0_i32 = arith.constant 0 : i32
    %c0_i32_0 = arith.constant 0 : i32
    return %arg0, %c0_i32 : i32, i32
  }
  func.func @transform_1(%arg0: i32) -> (i32, i32) {
    %c0_i32 = arith.constant 0 : i32
    %c0_i32_0 = arith.constant 0 : i32
    %c0_i32_1 = arith.constant 0 : i32
    return %c0_i32, %c0_i32_0 : i32, i32
  }
  func.func @transform_2(%arg0: i32) -> (i32, i32) {
    %c0_i32 = arith.constant 0 : i32
    %c0_i32_0 = arith.constant 0 : i32
    %c0_i32_1 = arith.constant 0 : i32
    return %c0_i32, %c0_i32_0 : i32, i32
  }
  func.func @transform_3(%arg0: i32) -> (i32, i32) {
    %c0_i32 = arith.constant 0 : i32
    %c0_i32_0 = arith.constant 0 : i32
    %c0_i32_1 = arith.constant 0 : i32
    return %c0_i32, %c0_i32_0 : i32, i32
  }
  func.func @transform_4(%arg0: i32) -> (i32, i32) {
    %c0_i32 = arith.constant 0 : i32
    %c0_i32_0 = arith.constant 0 : i32
    %c0_i32_1 = arith.constant 0 : i32
    return %c0_i32, %c0_i32_0 : i32, i32
  }
  func.func @transform_5(%arg0: i32) -> (i32, i32) {
    %c0_i32 = arith.constant 0 : i32
    %c0_i32_0 = arith.constant 0 : i32
    %c0_i32_1 = arith.constant 0 : i32
    return %c0_i32, %c0_i32_0 : i32, i32
  }
  func.func @transform_6(%arg0: i32) -> (i32, i32) {
    %c0_i32 = arith.constant 0 : i32
    %c0_i32_0 = arith.constant 0 : i32
    %c0_i32_1 = arith.constant 0 : i32
    return %c0_i32, %c0_i32_0 : i32, i32
  }
  func.func @transform_7(%arg0: i32) -> (i32, i32) {
    %c0_i32 = arith.constant 0 : i32
    %c0_i32_0 = arith.constant 0 : i32
    %c0_i32_1 = arith.constant 0 : i32
    return %c0_i32, %c0_i32_0 : i32, i32
  }
  func.func @transform_8(%arg0: i32) -> i32 {
    %c0_i32 = arith.constant 0 : i32
    %c0_i32_0 = arith.constant 0 : i32
    return %c0_i32 : i32
  }
  func.func @transform_9(%arg0: i32) -> (i32, i32) {
    %c0_i32 = arith.constant 0 : i32
    %c0_i32_0 = arith.constant 0 : i32
    return %arg0, %c0_i32 : i32, i32
  }
  func.func @transform_10(%arg0: i32) -> (i32, i32) {
    %c0_i32 = arith.constant 0 : i32
    %c0_i32_0 = arith.constant 0 : i32
    return %arg0, %c0_i32 : i32, i32
  }
}

</mosaic_0001>

<llo_original>
// kernel: tpu_custom_call.1
$region0: #{tpu_custom_call.1}
  #allocation0 [shape = 'u32[]', space=smem, size = 0x4, offset = 0x4, fixed_abs, tag = 'smem constant byte address 0x4 - core index']
  #allocation1 [shape = 'u32[144,128]{1,0:T(1,128)}', space=vmem, size = 0x12000, scoped, tag = 'internal scratch']
  %s0 = inlined_call_operand.hbm [shape: f32[8,128], index: 0, kind: input, shape index: {}]
  %s1 = inlined_call_operand.vmem [shape: f32[1,128], index: 1, kind: input, shape index: {}]
  %s2 = inlined_call_operand.hbm [shape: bf16[128,128], index: 2, kind: input, shape index: {}]
  %s3 = inlined_call_operand.vmem [shape: f32[1,128], index: 3, kind: input, shape index: {}]
  %s4 = inlined_call_operand.hbm [shape: bf16[128,128], index: 4, kind: input, shape index: {}]
  %s5 = inlined_call_operand.vmem [shape: f32[1,128], index: 5, kind: input, shape index: {}]
  %s6 = inlined_call_operand.hbm [shape: bf16[128,256], index: 6, kind: input, shape index: {}]
  %s7 = inlined_call_operand.vmem [shape: f32[1,256], index: 7, kind: input, shape index: {}]
  %s8 = inlined_call_operand.vmem [shape: f32[2], index: 8, kind: input, shape index: {}]
  %s9 = inlined_call_operand.hbm [shape: f32[8,128], index: 9, kind: output, shape index: {0}]
  %s10 = inlined_call_operand.hbm [shape: f32[8,128], index: 10, kind: output, shape index: {1}]
  %11 = xla_tuple %s9, %s10
  %s12 = sld [smem:[#allocation0]]
  $region74: #{tpu_custom_call.1} parent=0
    _
  %s14 = ssub.s32 1, %s12
  %s15 = scalar_select 0, %s14, %s12
  $region1: #{tpu_custom_call.1} parent=0
    #allocation2 [shape = 'u8[4096]{0}', space=vmem, size = 0x1000, scoped, tag = 'input window, operand 0, single buffered']
    #allocation3 [shape = 's32[1]{0}', space=sflag, size = 0x4, scoped, tag = 'scoped memory for tpu_custom_call.1']
    #allocation4 [shape = 's32[1]{0}', space=sflag, size = 0x4, scoped, tag = 'scoped memory for tpu_custom_call.1']
    #allocation5 [shape = 's32[1]{0}', space=sflag, size = 0x4, scoped, tag = 'scoped memory for tpu_custom_call.1']
    #allocation6 [shape = 'u8[32768]{0}', space=vmem, size = 0x8000, scoped, tag = 'input window, operand 2, single buffered']
    #allocation7 [shape = 's32[1]{0}', space=sflag, size = 0x4, scoped, tag = 'scoped memory for tpu_custom_call.1']
    #allocation8 [shape = 'u8[32768]{0}', space=vmem, size = 0x8000, scoped, tag = 'input window, operand 4, single buffered']
    #allocation9 [shape = 'u8[65536]{0}', space=vmem, size = 0x10000, scoped, tag = 'input window, operand 6, single buffered']
    #allocation10 [shape = 's32[1]{0}', space=sflag, size = 0x4, scoped, tag = 'scoped memory for tpu_custom_call.1']
    #allocation11 [shape = 'u8[512]{0}', space=smem, size = 0x200, scoped, tag = 'input window, operand 8, single buffered']
    #allocation12 [shape = 'u8[4096]{0}', space=vmem, size = 0x1000, scoped, tag = 'output window, operand 0, single buffered']
    #allocation13 [shape = 'u8[4096]{0}', space=vmem, size = 0x1000, scoped, tag = 'output window, operand 1, single buffered']
    #allocation14 [shape = 's32[1]{0}', space=sflag, size = 0x4, scoped, tag = 'scoped memory for tpu_custom_call.1']
    %16 = vsyncpa [#allocation3], 0
    %17 = vsyncpa [#allocation7], 0
    %18 = vsyncpa [#allocation10], 0
    %19 = vsyncpa [#allocation5], 0
    %20 = vsyncpa [#allocation4], 0
    %21 = vsyncpa [#allocation14], 0
    // Predicated region
    $region2: #{tpu_custom_call.1} parent=1 // pred_check
      _
    $region3: #{tpu_custom_call.1} parent=1 // pred_check_branch
      %23 = sbr.rel (0) target = $region5
    $region4: #{tpu_custom_call.1} parent=1 // pred_region
      %s25 = ssub.s32 128, 128
      %26 = vsyncadd [#allocation3], %s25
      %s28 = sshll.u32 [#allocation2], 4
      %s29 = int_to_ptr.vmem [resolvable:$true] %s28
      %31 = dma.hbm_to_vmem [thread:$0]  %s0, 128, %s29, [#allocation3]
    $region5: #{tpu_custom_call.1} parent=1 // pred_fallthru
      _
    // Predicated region
    $region6: #{tpu_custom_call.1} parent=1 // pred_check
      _
    $region7: #{tpu_custom_call.1} parent=1 // pred_check_branch
      %33 = sbr.rel (0) target = $region9
    $region8: #{tpu_custom_call.1} parent=1 // pred_region
      _
    $region9: #{tpu_custom_call.1} parent=1 // pred_fallthru
      _
    // Predicated region
    $region10: #{tpu_custom_call.1} parent=1 // pred_check
      _
    $region11: #{tpu_custom_call.1} parent=1 // pred_check_branch
      %35 = sbr.rel (0) target = $region13
    $region12: #{tpu_custom_call.1} parent=1 // pred_region
      %s37 = ssub.s32 1024, 1024
      %38 = vsyncadd [#allocation7], %s37
      %s39 = sshll.u32 [#allocation6], 4
      %s40 = int_to_ptr.vmem [resolvable:$true] %s39
      %45 = dma.hbm_to_vmem [thread:$0]  %s2, 1024, %s40, [#allocation7], 64, 64, 4
    $region13: #{tpu_custom_call.1} parent=1 // pred_fallthru
      _
    // Predicated region
    $region14: #{tpu_custom_call.1} parent=1 // pred_check
      _
    $region15: #{tpu_custom_call.1} parent=1 // pred_check_branch
      %47 = sbr.rel (0) target = $region17
    $region16: #{tpu_custom_call.1} parent=1 // pred_region
      _
    $region17: #{tpu_custom_call.1} parent=1 // pred_fallthru
      _
    // Predicated region
    $region18: #{tpu_custom_call.1} parent=1 // pred_check
      _
    $region19: #{tpu_custom_call.1} parent=1 // pred_check_branch
      %49 = sbr.rel (0) target = $region21
    $region20: #{tpu_custom_call.1} parent=1 // pred_region
      %s51 = ssub.s32 1024, 1024
      %52 = vsyncadd [#allocation7], %s51
      %s53 = sshll.u32 [#allocation8], 4
      %s54 = int_to_ptr.vmem [resolvable:$true] %s53
      %59 = dma.hbm_to_vmem [thread:$0]  %s4, 1024, %s54, [#allocation7], 64, 64, 4
    $region21: #{tpu_custom_call.1} parent=1 // pred_fallthru
      _
    // Predicated region
    $region22: #{tpu_custom_call.1} parent=1 // pred_check
      _
    $region23: #{tpu_custom_call.1} parent=1 // pred_check_branch
      %61 = sbr.rel (0) target = $region25
    $region24: #{tpu_custom_call.1} parent=1 // pred_region
      _
    $region25: #{tpu_custom_call.1} parent=1 // pred_fallthru
      _
    // Predicated region
    $region26: #{tpu_custom_call.1} parent=1 // pred_check
      _
    $region27: #{tpu_custom_call.1} parent=1 // pred_check_branch
      %63 = sbr.rel (0) target = $region29
    $region28: #{tpu_custom_call.1} parent=1 // pred_region
      %s65 = ssub.s32 2048, 2048
      %66 = vsyncadd [#allocation10], %s65
      %s67 = sshll.u32 [#allocation9], 4
      %s68 = int_to_ptr.vmem [resolvable:$true] %s67
      %73 = dma.hbm_to_vmem [thread:$0]  %s6, 2048, %s68, [#allocation10], 128, 128, 8
    $region29: #{tpu_custom_call.1} parent=1 // pred_fallthru
      _
    // Predicated region
    $region30: #{tpu_custom_call.1} parent=1 // pred_check
      _
    $region31: #{tpu_custom_call.1} parent=1 // pred_check_branch
      %75 = sbr.rel (0) target = $region33
    $region32: #{tpu_custom_call.1} parent=1 // pred_region
      _
    $region33: #{tpu_custom_call.1} parent=1 // pred_fallthru
      _
    // Predicated region
    $region34: #{tpu_custom_call.1} parent=1 // pred_check
      _
    $region35: #{tpu_custom_call.1} parent=1 // pred_check_branch
      %77 = sbr.rel (0) target = $region37
    $region36: #{tpu_custom_call.1} parent=1 // pred_region
      %s79 = ssub.s32 16, 16
      %80 = vsyncadd [#allocation5], %s79
      %s82 = sshll.u32 %s8, 4
      %s83 = int_to_ptr.vmem [resolvable:$true] %s82
      %85 = dma.vmem_to_smem %s83, 16, [#allocation11], [#allocation5]
    $region37: #{tpu_custom_call.1} parent=1 // pred_fallthru
      _
    // Predicated region
    $region38: #{tpu_custom_call.1} parent=1 // pred_check
      _
    $region39: #{tpu_custom_call.1} parent=1 // pred_check_branch
      %87 = sbr.rel (0) target = $region41
    $region40: #{tpu_custom_call.1} parent=1 // pred_region
      %88 = dma.done [#allocation3], 128
    $region41: #{tpu_custom_call.1} parent=1 // pred_fallthru
      _
    // Predicated region
    $region42: #{tpu_custom_call.1} parent=1 // pred_check
      _
    $region43: #{tpu_custom_call.1} parent=1 // pred_check_branch
      %90 = sbr.rel (0) target = $region45
    $region44: #{tpu_custom_call.1} parent=1 // pred_region
      %91 = dma.done [#allocation7], 1024
    $region45: #{tpu_custom_call.1} parent=1 // pred_fallthru
      _
    // Predicated region
    $region46: #{tpu_custom_call.1} parent=1 // pred_check
      _
    $region47: #{tpu_custom_call.1} parent=1 // pred_check_branch
      %93 = sbr.rel (0) target = $region49
    $region48: #{tpu_custom_call.1} parent=1 // pred_region
      %94 = dma.done [#allocation7], 1024
    $region49: #{tpu_custom_call.1} parent=1 // pred_fallthru
      _
    // Predicated region
    $region50: #{tpu_custom_call.1} parent=1 // pred_check
      _
    $region51: #{tpu_custom_call.1} parent=1 // pred_check_branch
      %96 = sbr.rel (0) target = $region53
    $region52: #{tpu_custom_call.1} parent=1 // pred_region
      %97 = dma.done [#allocation10], 2048
    $region53: #{tpu_custom_call.1} parent=1 // pred_fallthru
      _
    // Predicated region
    $region54: #{tpu_custom_call.1} parent=1 // pred_check
      _
    $region55: #{tpu_custom_call.1} parent=1 // pred_check_branch
      %99 = sbr.rel (0) target = $region57
    $region56: #{tpu_custom_call.1} parent=1 // pred_region
      %100 = dma.done [#allocation5], 16
    $region57: #{tpu_custom_call.1} parent=1 // pred_fallthru
      _
    %101 = sfence
    %v103 = vld [vmem:[#allocation2] sm:$0xff]
    %v104 = vld [vmem:[%s1] sm:$0x1]
    %v106 = vlaneseq
    %v107 = vshrl.u32 %v106, 7
    %v108 = vsub.s32 0, %v107
    %v109 = vrot.slane %v104, %v108
    %v111 = vmul.f32 %v103, %v109
    %v112 = vpack.c.bf16 %v111, %v111
    %v113 = vld [vmem:[#allocation6] sm:$0xf]
    %v114 = vld [vmem:[#allocation6 + $0x4] sm:$0xf]
    %v115 = vld [vmem:[#allocation6 + $0x8] sm:$0xf]
    %v116 = vld [vmem:[#allocation6 + $0xc] sm:$0xf]
    %v117 = vld [vmem:[#allocation6 + $0x10] sm:$0xf]
    %v118 = vld [vmem:[#allocation6 + $0x14] sm:$0xf]
    %v119 = vld [vmem:[#allocation6 + $0x18] sm:$0xf]
    %v120 = vld [vmem:[#allocation6 + $0x1c] sm:$0xf]
    %v121 = vld [vmem:[#allocation6 + $0x20] sm:$0xf]
    %v122 = vld [vmem:[#allocation6 + $0x24] sm:$0xf]
    %v123 = vld [vmem:[#allocation6 + $0x28] sm:$0xf]
    %v124 = vld [vmem:[#allocation6 + $0x2c] sm:$0xf]
    %v125 = vld [vmem:[#allocation6 + $0x30] sm:$0xf]
    %v126 = vld [vmem:[#allocation6 + $0x34] sm:$0xf]
    %v127 = vld [vmem:[#allocation6 + $0x38] sm:$0xf]
    %v128 = vld [vmem:[#allocation6 + $0x3c] sm:$0xf]
    %v129 = vld [vmem:[%s3] sm:$0x1]
    %v131 = vlaneseq
    %v132 = vshrl.u32 %v131, 7
    %v133 = vsub.s32 0, %v132
    %v134 = vrot.slane %v129, %v133
    %v152 = vunpack.c.l.b16 %v113
    %v153 = vunpack.c.l.b16 %v114
    %v154 = vunpack.c.l.b16 %v115
    %v155 = vunpack.c.l.b16 %v116
    %v156 = vunpack.c.l.b16 %v117
    %v157 = vunpack.c.l.b16 %v118
    %v158 = vunpack.c.l.b16 %v119
    %v159 = vunpack.c.l.b16 %v120
    %v160 = vunpack.c.l.b16 %v121
    %v161 = vunpack.c.l.b16 %v122
    %v162 = vunpack.c.l.b16 %v123
    %v163 = vunpack.c.l.b16 %v124
    %v164 = vunpack.c.l.b16 %v125
    %v165 = vunpack.c.l.b16 %v126
    %v166 = vunpack.c.l.b16 %v127
    %v167 = vunpack.c.l.b16 %v128
    %v168 = vpack.c.b16 %v153, %v152
    %v169 = vpack.c.b16 %v155, %v154
    %v170 = vpack.c.b16 %v157, %v156
    %v171 = vpack.c.b16 %v159, %v158
    %v172 = vpack.c.b16 %v161, %v160
    %v173 = vpack.c.b16 %v163, %v162
    %v174 = vpack.c.b16 %v165, %v164
    %v175 = vpack.c.b16 %v167, %v166
    %184 = vmatprep.subr.bf16.mxu0 0
    %185 = vmatpush1.bf16.msra.mxu0 %v175
    %186 = vmatprep.subr.bf16.mxu0 0
    %187 = vmatpush1.bf16.msra.mxu0 %v174
    %188 = vmatprep.subr.bf16.mxu0 0
    %189 = vmatpush1.bf16.msra.mxu0 %v173
    %190 = vmatprep.subr.bf16.mxu0 0
    %191 = vmatpush1.bf16.msra.mxu0 %v172
    %192 = vmatprep.subr.bf16.mxu0 0
    %193 = vmatpush1.bf16.msra.mxu0 %v171
    %194 = vmatprep.subr.bf16.mxu0 0
    %195 = vmatpush1.bf16.msra.mxu0 %v170
    %196 = vmatprep.subr.bf16.mxu0 0
    %197 = vmatpush1.bf16.msra.mxu0 %v169
    %198 = vmatprep.subr.bf16.mxu0 0
    %199 = vmatpush1.bf16.msra.mxu0 %v168
    %200 = vmatprep.subr.bf16.mxu0 0
    %201 = vmatpush2.bf16.msra.mxu0 0
    %202 = vmatprep.subr.bf16.mxu0 0
    %203 = vmatpush2.bf16.msra.mxu0 0
    %204 = vmatprep.subr.bf16.mxu0 0
    %205 = vmatpush2.bf16.msra.mxu0 0
    %206 = vmatprep.subr.bf16.mxu0 0
    %207 = vmatpush2.bf16.msra.mxu0 0
    %208 = vmatprep.subr.bf16.mxu0 0
    %209 = vmatpush2.bf16.msra.mxu0 0
    %210 = vmatprep.subr.bf16.mxu0 0
    %211 = vmatpush2.bf16.msra.mxu0 0
    %212 = vmatprep.subr.bf16.mxu0 0
    %213 = vmatpush2.bf16.msra.mxu0 0
    %214 = vmatprep.subr.bf16.mxu0 0
    %215 = vmatpush2.bf16.msra.mxu0 0
    %216 = vmatprep.mubr.bf16.mxu0 0
    %217 = vmatmul.mubr.bf16.gmra.mxu0 %v112
    %v218 = vpop.f32.mrf.mxu0
    %v219 = vadd.f32 %v134, %v218
    %v220 = vpop.f32.mrf.mxu0
    %v221 = vpop.f32.mrf.mxu0
    %v222 = vpop.f32.mrf.mxu0
    %223 = vdwg.mxu0
    %v224 = vmax.f32 %v219, 0.0
    %v225 = vpack.c.bf16 %v224, %v224
    %v226 = vld [vmem:[#allocation8] sm:$0xf]
    %v227 = vld [vmem:[#allocation8 + $0x4] sm:$0xf]
    %v228 = vld [vmem:[#allocation8 + $0x8] sm:$0xf]
    %v229 = vld [vmem:[#allocation8 + $0xc] sm:$0xf]
    %v230 = vld [vmem:[#allocation8 + $0x10] sm:$0xf]
    %v231 = vld [vmem:[#allocation8 + $0x14] sm:$0xf]
    %v232 = vld [vmem:[#allocation8 + $0x18] sm:$0xf]
    %v233 = vld [vmem:[#allocation8 + $0x1c] sm:$0xf]
    %v234 = vld [vmem:[#allocation8 + $0x20] sm:$0xf]
    %v235 = vld [vmem:[#allocation8 + $0x24] sm:$0xf]
    %v236 = vld [vmem:[#allocation8 + $0x28] sm:$0xf]
    %v237 = vld [vmem:[#allocation8 + $0x2c] sm:$0xf]
    %v238 = vld [vmem:[#allocation8 + $0x30] sm:$0xf]
    %v239 = vld [vmem:[#allocation8 + $0x34] sm:$0xf]
    %v240 = vld [vmem:[#allocation8 + $0x38] sm:$0xf]
    %v241 = vld [vmem:[#allocation8 + $0x3c] sm:$0xf]
    %v242 = vld [vmem:[%s5] sm:$0x1]
    %v244 = vlaneseq
    %v245 = vshrl.u32 %v244, 7
    %v246 = vsub.s32 0, %v245
    %v247 = vrot.slane %v242, %v246
    %v265 = vunpack.c.l.b16 %v226
    %v266 = vunpack.c.l.b16 %v227
    %v267 = vunpack.c.l.b16 %v228
    %v268 = vunpack.c.l.b16 %v229
    %v269 = vunpack.c.l.b16 %v230
    %v270 = vunpack.c.l.b16 %v231
    %v271 = vunpack.c.l.b16 %v232
    %v272 = vunpack.c.l.b16 %v233
    %v273 = vunpack.c.l.b16 %v234
    %v274 = vunpack.c.l.b16 %v235
    %v275 = vunpack.c.l.b16 %v236
    %v276 = vunpack.c.l.b16 %v237
    %v277 = vunpack.c.l.b16 %v238
    %v278 = vunpack.c.l.b16 %v239
    %v279 = vunpack.c.l.b16 %v240
    %v280 = vunpack.c.l.b16 %v241
    %v281 = vpack.c.b16 %v266, %v265
    %v282 = vpack.c.b16 %v268, %v267
    %v283 = vpack.c.b16 %v270, %v269
    %v284 = vpack.c.b16 %v272, %v271
    %v285 = vpack.c.b16 %v274, %v273
    %v286 = vpack.c.b16 %v276, %v275
    %v287 = vpack.c.b16 %v278, %v277
    %v288 = vpack.c.b16 %v280, %v279
    %297 = vmatprep.subr.bf16.mxu0 0
    %298 = vmatpush1.bf16.msra.mxu0 %v288
    %299 = vmatprep.subr.bf16.mxu0 0
    %300 = vmatpush1.bf16.msra.mxu0 %v287
    %301 = vmatprep.subr.bf16.mxu0 0
    %302 = vmatpush1.bf16.msra.mxu0 %v286
    %303 = vmatprep.subr.bf16.mxu0 0
    %304 = vmatpush1.bf16.msra.mxu0 %v285
    %305 = vmatprep.subr.bf16.mxu0 0
    %306 = vmatpush1.bf16.msra.mxu0 %v284
    %307 = vmatprep.subr.bf16.mxu0 0
    %308 = vmatpush1.bf16.msra.mxu0 %v283
    %309 = vmatprep.subr.bf16.mxu0 0
    %310 = vmatpush1.bf16.msra.mxu0 %v282
    %311 = vmatprep.subr.bf16.mxu0 0
    %312 = vmatpush1.bf16.msra.mxu0 %v281
    %313 = vmatprep.subr.bf16.mxu0 0
    %314 = vmatpush2.bf16.msra.mxu0 0
    %315 = vmatprep.subr.bf16.mxu0 0
    %316 = vmatpush2.bf16.msra.mxu0 0
    %317 = vmatprep.subr.bf16.mxu0 0
    %318 = vmatpush2.bf16.msra.mxu0 0
    %319 = vmatprep.subr.bf16.mxu0 0
    %320 = vmatpush2.bf16.msra.mxu0 0
    %321 = vmatprep.subr.bf16.mxu0 0
    %322 = vmatpush2.bf16.msra.mxu0 0
    %323 = vmatprep.subr.bf16.mxu0 0
    %324 = vmatpush2.bf16.msra.mxu0 0
    %325 = vmatprep.subr.bf16.mxu0 0
    %326 = vmatpush2.bf16.msra.mxu0 0
    %327 = vmatprep.subr.bf16.mxu0 0
    %328 = vmatpush2.bf16.msra.mxu0 0
    %329 = vmatprep.mubr.bf16.mxu0 0
    %330 = vmatmul.mubr.bf16.gmra.mxu0 %v225
    %v331 = vpop.f32.mrf.mxu0
    %v332 = vadd.f32 %v247, %v331
    %v333 = vpop.f32.mrf.mxu0
    %v334 = vpop.f32.mrf.mxu0
    %v335 = vpop.f32.mrf.mxu0
    %336 = vdwg.mxu0
    %v337 = vmax.f32 %v332, 0.0
    %v338 = vpack.c.bf16 %v337, %v337
    %v339 = vld [vmem:[#allocation9] sm:$0xff]
    %v340 = vld [vmem:[#allocation9 + $0x8] sm:$0xff]
    %v341 = vld [vmem:[#allocation9 + $0x10] sm:$0xff]
    %v342 = vld [vmem:[#allocation9 + $0x18] sm:$0xff]
    %v343 = vld [vmem:[#allocation9 + $0x20] sm:$0xff]
    %v344 = vld [vmem:[#allocation9 + $0x28] sm:$0xff]
    %v345 = vld [vmem:[#allocation9 + $0x30] sm:$0xff]
    %v346 = vld [vmem:[#allocation9 + $0x38] sm:$0xff]
    %v347 = vld [vmem:[#allocation9 + $0x40] sm:$0xff]
    %v348 = vld [vmem:[#allocation9 + $0x48] sm:$0xff]
    %v349 = vld [vmem:[#allocation9 + $0x50] sm:$0xff]
    %v350 = vld [vmem:[#allocation9 + $0x58] sm:$0xff]
    %v351 = vld [vmem:[#allocation9 + $0x60] sm:$0xff]
    %v352 = vld [vmem:[#allocation9 + $0x68] sm:$0xff]
    %v353 = vld [vmem:[#allocation9 + $0x70] sm:$0xff]
    %v354 = vld [vmem:[#allocation9 + $0x78] sm:$0xff]
    %v355 = vld [vmem:[%s7] sm:$0x3]
    %v357 = vlaneseq
    %v358 = vshrl.u32 %v357, 7
    %v359 = vsub.s32 0, %v358
    %v360 = vrot.slane %v355, %v359
    %v361 = vlaneseq
    %v362 = vshrl.u32 %v361, 7
    %v363 = vsub.s32 1, %v362
    %v364 = vrot.slane %v355, %v363
    %v383 = vunpack.c.l.b16 %v339
    %v384 = vunpack.c.h.b16 %v339
    %v385 = vunpack.c.l.b16 %v340
    %v386 = vunpack.c.h.b16 %v340
    %v387 = vunpack.c.l.b16 %v341
    %v388 = vunpack.c.h.b16 %v341
    %v389 = vunpack.c.l.b16 %v342
    %v390 = vunpack.c.h.b16 %v342
    %v391 = vunpack.c.l.b16 %v343
    %v392 = vunpack.c.h.b16 %v343
    %v393 = vunpack.c.l.b16 %v344
    %v394 = vunpack.c.h.b16 %v344
    %v395 = vunpack.c.l.b16 %v345
    %v396 = vunpack.c.h.b16 %v345
    %v397 = vunpack.c.l.b16 %v346
    %v398 = vunpack.c.h.b16 %v346
    %v399 = vunpack.c.l.b16 %v347
    %v400 = vunpack.c.h.b16 %v347
    %v401 = vunpack.c.l.b16 %v348
    %v402 = vunpack.c.h.b16 %v348
    %v403 = vunpack.c.l.b16 %v349
    %v404 = vunpack.c.h.b16 %v349
    %v405 = vunpack.c.l.b16 %v350
    %v406 = vunpack.c.h.b16 %v350
    %v407 = vunpack.c.l.b16 %v351
    %v408 = vunpack.c.h.b16 %v351
    %v409 = vunpack.c.l.b16 %v352
    %v410 = vunpack.c.h.b16 %v352
    %v411 = vunpack.c.l.b16 %v353
    %v412 = vunpack.c.h.b16 %v353
    %v413 = vunpack.c.l.b16 %v354
    %v414 = vunpack.c.h.b16 %v354
    %v415 = vpack.c.b16 %v385, %v383
    %v416 = vpack.c.b16 %v386, %v384
    %v417 = vpack.c.b16 %v389, %v387
    %v418 = vpack.c.b16 %v390, %v388
    %v419 = vpack.c.b16 %v393, %v391
    %v420 = vpack.c.b16 %v394, %v392
    %v421 = vpack.c.b16 %v397, %v395
    %v422 = vpack.c.b16 %v398, %v396
    %v423 = vpack.c.b16 %v401, %v399
    %v424 = vpack.c.b16 %v402, %v400
    %v425 = vpack.c.b16 %v405, %v403
    %v426 = vpack.c.b16 %v406, %v404
    %v427 = vpack.c.b16 %v409, %v407
    %v428 = vpack.c.b16 %v410, %v408
    %v429 = vpack.c.b16 %v413, %v411
    %v430 = vpack.c.b16 %v414, %v412
    %447 = vmatprep.subr.bf16.mxu0 %v430
    %448 = vmatpush1.bf16.msra.mxu0 %v429
    %449 = vmatprep.subr.bf16.mxu0 %v428
    %450 = vmatpush1.bf16.msra.mxu0 %v427
    %451 = vmatprep.subr.bf16.mxu0 %v426
    %452 = vmatpush1.bf16.msra.mxu0 %v425
    %453 = vmatprep.subr.bf16.mxu0 %v424
    %454 = vmatpush1.bf16.msra.mxu0 %v423
    %455 = vmatprep.subr.bf16.mxu0 %v422
    %456 = vmatpush1.bf16.msra.mxu0 %v421
    %457 = vmatprep.subr.bf16.mxu0 %v420
    %458 = vmatpush1.bf16.msra.mxu0 %v419
    %459 = vmatprep.subr.bf16.mxu0 %v418
    %460 = vmatpush1.bf16.msra.mxu0 %v417
    %461 = vmatprep.subr.bf16.mxu0 %v416
    %462 = vmatpush1.bf16.msra.mxu0 %v415
    %463 = vmatprep.subr.bf16.mxu0 0
    %464 = vmatpush2.bf16.msra.mxu0 0
    %465 = vmatprep.subr.bf16.mxu0 0
    %466 = vmatpush2.bf16.msra.mxu0 0
    %467 = vmatprep.subr.bf16.mxu0 0
    %468 = vmatpush2.bf16.msra.mxu0 0
    %469 = vmatprep.subr.bf16.mxu0 0
    %470 = vmatpush2.bf16.msra.mxu0 0
    %471 = vmatprep.subr.bf16.mxu0 0
    %472 = vmatpush2.bf16.msra.mxu0 0
    %473 = vmatprep.subr.bf16.mxu0 0
    %474 = vmatpush2.bf16.msra.mxu0 0
    %475 = vmatprep.subr.bf16.mxu0 0
    %476 = vmatpush2.bf16.msra.mxu0 0
    %477 = vmatprep.subr.bf16.mxu0 0
    %478 = vmatpush2.bf16.msra.mxu0 0
    %479 = vmatprep.mubr.bf16.mxu0 0
    %480 = vmatmul.mubr.bf16.gmra.mxu0 %v338
    %v481 = vpop.f32.mrf.mxu0
    %v482 = vadd.f32 %v360, %v481
    %v483 = vpop.f32.mrf.mxu0
    %v484 = vadd.f32 %v364, %v483
    %v485 = vpop.f32.mrf.mxu0
    %v486 = vpop.f32.mrf.mxu0
    %487 = vdwg.mxu0
    %s488 = sld [smem:[#allocation11]]
    %s489 = sld [smem:[#allocation11 + $0x1]]
    %v490 = vsub.f32 1.0, %v104
    %v491 = vtanh.pop %v482
    %v492 = vstv %s488
    %v493 = vmul.f32 %v492, %v491
    %v494 = vstv %s489
    %v495 = vadd.f32 %v493, %v494
    %v497 = vlaneseq
    %v498 = vshrl.u32 %v497, 7
    %v499 = vsub.s32 0, %v498
    %v500 = vrot.slane %v490, %v499
    %v502 = vmul.f32 %v495, %v500
    %v503 = vmul.f32 %v484, %v500
    %v504 = vmul.f32 %v502, 1.442695
    %v505 = vpow.pop %v504
    %v506 = vmul.f32 %v103, %v505
    %v507 = vadd.f32 %v506, %v503
    %508 = vst [vmem:[#allocation12] sm:$0xff] %v507
    %509 = vst [vmem:[#allocation13] sm:$0xff] %v502
    // Predicated region
    $region58: #{tpu_custom_call.1} parent=1 // pred_check
      _
    $region59: #{tpu_custom_call.1} parent=1 // pred_check_branch
      %511 = sbr.rel (0) target = $region61
    $region60: #{tpu_custom_call.1} parent=1 // pred_region
      %s513 = ssub.s32 128, 128
      %514 = vsyncadd [#allocation4], %s513
      %s516 = sshll.u32 [#allocation12], 4
      %s517 = int_to_ptr.vmem [resolvable:$true] %s516
      %519 = dma.vmem_to_hbm [thread:$0]  %s517, 128, %s9, [#allocation4]
    $region61: #{tpu_custom_call.1} parent=1 // pred_fallthru
      _
    // Predicated region
    $region62: #{tpu_custom_call.1} parent=1 // pred_check
      _
    $region63: #{tpu_custom_call.1} parent=1 // pred_check_branch
      %521 = sbr.rel (0) target = $region65
    $region64: #{tpu_custom_call.1} parent=1 // pred_region
      %s523 = ssub.s32 128, 128
      %524 = vsyncadd [#allocation14], %s523
      %s526 = sshll.u32 [#allocation13], 4
      %s527 = int_to_ptr.vmem [resolvable:$true] %s526
      %529 = dma.vmem_to_hbm [thread:$0]  %s527, 128, %s10, [#allocation14]
    $region65: #{tpu_custom_call.1} parent=1 // pred_fallthru
      _
    // Predicated region
    $region66: #{tpu_custom_call.1} parent=1 // pred_check
      _
    $region67: #{tpu_custom_call.1} parent=1 // pred_check_branch
      %531 = sbr.rel (0) target = $region69
    $region68: #{tpu_custom_call.1} parent=1 // pred_region
      %532 = dma.done [#allocation4], 128
    $region69: #{tpu_custom_call.1} parent=1 // pred_fallthru
      _
    // Predicated region
    $region70: #{tpu_custom_call.1} parent=1 // pred_check
      _
    $region71: #{tpu_custom_call.1} parent=1 // pred_check_branch
      %534 = sbr.rel (0) target = $region73
    $region72: #{tpu_custom_call.1} parent=1 // pred_region
      %535 = dma.done [#allocation14], 128
    $region73: #{tpu_custom_call.1} parent=1 // pred_fallthru
      _
    %536 = vsyncpa [#allocation3], 1
    %537 = vsyncpa [#allocation7], 1
    %538 = vsyncpa [#allocation10], 1
    %539 = vsyncpa [#allocation4], 1
    %540 = vsyncpa [#allocation14], 1
    %541 = vsyncpa [#allocation5], 1

</llo_original>
